<compile_context>
chip_gen: v5e
topology: v5e:2x2
jax: 0.10.0
libtpu: 0.0.40
codegen_flags: <defaults>
</compile_context>

<pallas_src>
import jax
import jax.numpy as jnp
from jax.experimental import pallas as pl
from jax.experimental.pallas import tpu as pltpu

LN_EPS = 1e-5                       # PyTorch nn.LayerNorm default
COMPUTE_DTYPE = jnp.bfloat16        # MXU operand dtype (full MXU rate on v5e/v6e/v7x)


def _cdiv(a, b):
    return -(-a // b)


def _round_up(x, m):
    return (x + m - 1) // m * m


def _vmem_limit_bytes():
    # Generation-aware VMEM budget: ~3/4 of physical capacity.
    #   v5e/v6e (128 MiB physical) -> ~96 MiB; v7x (64 MiB physical) -> 48 MiB.
    try:
        cap = pltpu.get_tpu_info().vmem_capacity_bytes
    except Exception:
        cap = 64 * 1024 * 1024
    return int(min(cap * 3 // 4, 100 * 1024 * 1024))


VMEM_LIMIT = _vmem_limit_bytes()


def _pick_row_tiling(rows, tm):
    """Pad rows only to the sublane multiple; pick a tm that (a) is a multiple
    of 16, (b) gives >=2 blocks on the parallel row axis when possible (v7x
    megacore), with masked partial edge blocks handled by Pallas."""
    rows_pad = _round_up(rows, 16)
    tm = min(tm, rows_pad)
    tm = _round_up(tm, 16)
    while _cdiv(rows_pad, tm) < 2 and tm >= 32:
        tm = _round_up(tm // 2, 16)
    return rows_pad, tm


def _relu_layernorm_f32(y, gamma, beta):
    """ReLU + LayerNorm on an f32 tile; single-pass (sum, sum-of-squares) stats.
    Stats stay in f32 (do not move this epilogue to bf16: E[x^2]-E[x]^2 would
    lose to cancellation)."""
    y = jnp.maximum(y, 0.0)
    n = y.shape[-1]
    s = jnp.sum(y, axis=-1, keepdims=True)
    s2 = jnp.sum(y * y, axis=-1, keepdims=True)
    mean = s * (1.0 / n)
    var = s2 * (1.0 / n) - mean * mean
    inv = jax.lax.rsqrt(var + LN_EPS)
    return (y - mean) * inv * gamma.astype(jnp.float32) + beta.astype(jnp.float32)


# ---------------------------------------------------------------------------
# Kernel 1: fused custom_layer1 -> custom_layer2
#   (Linear+bias -> ReLU -> LayerNorm) x 2 in one pass over row tiles.
#   Both (bf16) weight matrices stay resident in VMEM (constant index_maps,
#   single-buffered); the (tm, llm_hidden) intermediate never leaves VMEM.
# ---------------------------------------------------------------------------
def _fused_mlp_kernel(x_ref, w1_ref, b1_ref, g1_ref, beta1_ref,
                      w2_ref, b2_ref, g2_ref, beta2_ref, o_ref):
    # layer 1: bf16 MXU operands, f32 accumulation
    x = x_ref[...].astype(w1_ref.dtype)
    y = jnp.dot(x, w1_ref[...], preferred_element_type=jnp.float32)
    y = y + b1_ref[...].astype(jnp.float32)
    y = _relu_layernorm_f32(y, g1_ref[...], beta1_ref[...])
    # layer 2 (intermediate stays in VMEM, downcast only for the MXU)
    z = jnp.dot(y.astype(w2_ref.dtype), w2_ref[...],
                preferred_element_type=jnp.float32)
    z = z + b2_ref[...].astype(jnp.float32)
    z = _relu_layernorm_f32(z, g2_ref[...], beta2_ref[...])
    o_ref[...] = z.astype(o_ref.dtype)


def fused_custom_layers(x, w1, b1, g1, beta1, w2, b2, g2, beta2, *,
                        tm=256, compute_dtype=COMPUTE_DTYPE):
    """x: (rows, d_in). w1: (d_in, d_mid), w2: (d_mid, d_out). Returns (rows, d_out)."""
    rows, d_in = x.shape
    d_mid = w1.shape[1]
    d_out = w2.shape[1]

    # Bound the (tm, d_mid) f32 intermediate / spill pressure at real-LLM sizes.
    # TODO(synk): at OPT-scale hidden sizes, add a K grid axis with an f32 VMEM
    # accumulator (init/finalize via pl.when) so w1/w2 stream instead of being
    # fully resident; required once resident bf16 weights exceed ~20-24 MiB
    # under v7x's 64 MiB VMEM.
    if max(d_in, d_mid, d_out) >= 4096:
        tm = min(tm, 128)

    rows_pad, tm = _pick_row_tiling(rows, tm)
    if rows_pad != rows:
        x = jnp.pad(x, ((0, rows_pad - rows), (0, 0)))

    w1c = w1.astype(compute_dtype)
    w2c = w2.astype(compute_dtype)

    # Resident blocks: constant index_map, single-buffered (DMA issued once).
    def resident(shape):
        return pl.BlockSpec(shape, lambda i: (0, 0), pipeline_mode=pl.Buffered(1))

    # TODO(synk): if the model's hidden sizes are not multiples of 128, pad the
    # feature dims wrapper-side so the LN tiles / output stores stay lane-dense.
    out = pl.pallas_call(
        _fused_mlp_kernel,
        out_shape=jax.ShapeDtypeStruct((rows_pad, d_out), x.dtype),
        grid_spec=pltpu.PrefetchScalarGridSpec(
            num_scalar_prefetch=0,
            grid=(_cdiv(rows_pad, tm),),
            in_specs=[
                pl.BlockSpec((tm, d_in), lambda i: (i, 0)),
                resident((d_in, d_mid)),
                resident((1, d_mid)),
                resident((1, d_mid)),
                resident((1, d_mid)),
                resident((d_mid, d_out)),
                resident((1, d_out)),
                resident((1, d_out)),
                resident((1, d_out)),
            ],
            out_specs=pl.BlockSpec((tm, d_out), lambda i: (i, 0)),
        ),
        compiler_params=pltpu.CompilerParams(
            dimension_semantics=("parallel",),
            vmem_limit_bytes=VMEM_LIMIT,
        ),
    )(x, w1c, b1.reshape(1, -1), g1.reshape(1, -1), beta1.reshape(1, -1),
      w2c, b2.reshape(1, -1), g2.reshape(1, -1), beta2.reshape(1, -1))
    return out[:rows] if rows_pad != rows else out


# ---------------------------------------------------------------------------
# Kernel 2: FactorizedEmbedding  (x @ Wd) @ Wo, vocab-tiled.
#   h = x @ Wd is computed once per row tile at the first vocab tile (vocab
#   axis is innermost and "arbitrary") and cached in a VMEM scratch already in
#   the wo compute dtype, so the per-vocab-tile work is a single bf16 matmul.
# ---------------------------------------------------------------------------
def _factorized_proj_kernel(x_ref, wd_ref, wo_ref, o_ref, h_ref):
    @pl.when(pl.program_id(1) == 0)
    def _():
        h = jnp.dot(x_ref[...].astype(wd_ref.dtype), wd_ref[...],
                    preferred_element_type=jnp.float32)
        h_ref[...] = h.astype(h_ref.dtype)          # stored pre-cast to wo dtype
    o_ref[...] = jnp.dot(h_ref[...], wo_ref[...],
                         preferred_element_type=jnp.float32).astype(o_ref.dtype)


def factorized_embedding(x, w_dense, w_out, *, tm=256, tn=1024,
                         out_dtype=None, compute_dtype=COMPUTE_DTYPE):
    """x: (rows, hidden), w_dense: (hidden, bottleneck), w_out: (bottleneck, vocab)."""
    rows, hidden = x.shape
    bottleneck = w_dense.shape[1]
    vocab = w_out.shape[1]
    out_dtype = out_dtype or x.dtype

    rows_pad, tm = _pick_row_tiling(rows, tm)
    if rows_pad != rows:
        x = jnp.pad(x, ((0, rows_pad - rows), (0, 0)))

    # Lane-dense logits stores: pad the vocab to a multiple of 128; tn default
    # 1024 (multiple of 256, matches v6e/v7x MXU width) — sweep upward on v6e.
    vocab_pad = _round_up(vocab, 128)
    tn = min(tn, vocab_pad)
    if vocab_pad != vocab:
        w_out = jnp.pad(w_out, ((0, 0), (0, vocab_pad - vocab)))

    wd = w_dense.astype(compute_dtype)
    wo = w_out.astype(compute_dtype)

    # TODO(synk): to cut the dominant HBM traffic further (esp. v5e), fuse the
    # log-sum-exp / cross-entropy reduction here so the full (rows, vocab)
    # logits tensor is never written to HBM.
    out = pl.pallas_call(
        _factorized_proj_kernel,
        out_shape=jax.ShapeDtypeStruct((rows_pad, vocab_pad), out_dtype),
        grid_spec=pltpu.PrefetchScalarGridSpec(
            num_scalar_prefetch=0,
            grid=(_cdiv(rows_pad, tm), _cdiv(vocab_pad, tn)),
            in_specs=[
                pl.BlockSpec((tm, hidden), lambda i, j: (i, 0)),
                pl.BlockSpec((hidden, bottleneck), lambda i, j: (0, 0),
                             pipeline_mode=pl.Buffered(1)),
                # wo is the only streamed input; if the xprof trace shows
                # exposed DMA on this stream, set pipeline_mode=pl.Buffered(3).
                pl.BlockSpec((bottleneck, tn), lambda i, j: (0, j)),
            ],
            out_specs=pl.BlockSpec((tm, tn), lambda i, j: (i, j)),
            scratch_shapes=[pltpu.VMEM((tm, bottleneck), compute_dtype)],
        ),
        compiler_params=pltpu.CompilerParams(
            # vocab axis must stay sequential ("arbitrary") and innermost for
            # the h-cache; the row axis is "parallel" for megacore on v7x.
            dimension_semantics=("parallel", "arbitrary"),
            vmem_limit_bytes=VMEM_LIMIT,
        ),
    )(x, wd, wo)
    return out[:rows, :vocab]


# ---------------------------------------------------------------------------
# Parameter construction (deterministic, shapes implied by CustomLLM.__init__)
# Master params stay in f32; wrappers cast the matmul weights to bf16.
# ---------------------------------------------------------------------------
def init_params(key, *, vocab_size, he_hidden, llm_hidden, bottleneck,
                dtype=jnp.float32):
    ks = jax.random.split(key, 5)
    s = lambda k, shp, sc=0.02: (sc * jax.random.normal(k, shp, jnp.float32)).astype(dtype)
    return {
        # frozen he_en_model.shared embedding (stand-in for the HF stacks)
        "shared_emb": s(ks[0], (vocab_size, he_hidden)),
        # custom_layer1: Linear(he_hidden -> llm_hidden) + ReLU + LayerNorm(llm_hidden)
        "w1": s(ks[1], (he_hidden, llm_hidden)),
        "b1": jnp.zeros((llm_hidden,), dtype),
        "g1": jnp.ones((llm_hidden,), dtype),
        "beta1": jnp.zeros((llm_hidden,), dtype),
        # custom_layer2: Linear(llm_hidden -> he_hidden) + ReLU + LayerNorm(he_hidden)
        "w2": s(ks[2], (llm_hidden, he_hidden)),
        "b2": jnp.zeros((he_hidden,), dtype),
        "g2": jnp.ones((he_hidden,), dtype),
        "beta2": jnp.zeros((he_hidden,), dtype),
        # output_projection: FactorizedEmbedding(he_hidden, vocab, bottleneck)
        "wd": s(ks[3], (he_hidden, bottleneck)),
        "wo": s(ks[4], (bottleneck, vocab_size)),
    }


# ---------------------------------------------------------------------------
# CustomLLM.forward (Pallas for the trainable hot path, glue in plain JAX)
# ---------------------------------------------------------------------------
HE_EN_START_TOKEN = 1
EN_HE_START_TOKEN = 1


def custom_llm_forward(params, input_ids, en_target_ids, he_target_ids,
                       attention_mask=None, logits_dtype=jnp.float32):
    input_ids = input_ids.astype(jnp.int32)        # .long()
    en_target_ids = en_target_ids.astype(jnp.int32)
    he_target_ids = he_target_ids.astype(jnp.int32)
    B, S = en_target_ids.shape

    # shifted decoder inputs (same construction as the PyTorch forward)
    he_en_dec_in = jnp.concatenate(
        [jnp.full((B, 1), HE_EN_START_TOKEN, jnp.int32), en_target_ids[:, :-1]], axis=1)
    en_he_dec_in = jnp.concatenate(
        [jnp.full((B, 1), EN_HE_START_TOKEN, jnp.int32), he_target_ids[:, :-1]], axis=1)

    # TODO(synk): frozen he_en_model encoder/decoder are external pretrained HF
    # submodules with unspecified architecture; stand in with the shared
    # embedding lookup of the shifted decoder inputs.
    he_en_decoder_output = params["shared_emb"][he_en_dec_in]          # (B, S, H_he)
    del input_ids  # consumed only by the (untranslatable) he_en encoder

    rows = B * S
    h_he = he_en_decoder_output.shape[-1]

    # custom_layer1 + custom_layer2 fused into one Pallas kernel
    # TODO(synk): frozen llm_model.model.decoder.layers (OPT decoder blocks)
    # would sit between the two custom layers; skipped here.
    x = fused_custom_layers(
        he_en_decoder_output.reshape(rows, h_he),
        params["w1"], params["b1"], params["g1"], params["beta1"],
        params["w2"], params["b2"], params["g2"], params["beta2"])

    # TODO(synk): frozen en_he encoder and decoder layers skipped; `x` stands in
    # for the final decoder hidden state (en_he_dec_in computed for fidelity).
    final_hidden = x                                                    # (B*S, H_he)
    del en_he_dec_in

    # output_projection: FactorizedEmbedding (Pallas, vocab-tiled)
    # (pass logits_dtype=jnp.bfloat16 to halve the HBM logits write on v5e)
    logits = factorized_embedding(final_hidden, params["wd"], params["wo"],
                                  out_dtype=logits_dtype)
    return logits.reshape(B, S, -1)


if __name__ == "__main__":
    # small shapes consistent with the forward
    B, S = 2, 8
    VOCAB, HE_HIDDEN, LLM_HIDDEN, BOTTLENECK = 128, 32, 64, 16

    key = jax.random.PRNGKey(0)
    k_p, k_in, k_en, k_he = jax.random.split(key, 4)

    params = init_params(k_p, vocab_size=VOCAB, he_hidden=HE_HIDDEN,
                         llm_hidden=LLM_HIDDEN, bottleneck=BOTTLENECK)

    input_ids = jax.random.randint(k_in, (B, S), 0, VOCAB, jnp.int32)
    en_target_ids = jax.random.randint(k_en, (B, S), 0, VOCAB, jnp.int32)
    he_target_ids = jax.random.randint(k_he, (B, S), 0, VOCAB, jnp.int32)

    logits = custom_llm_forward(params, input_ids, en_target_ids, he_target_ids)
    jax.block_until_ready(logits)
    assert logits.shape == (B, S, VOCAB) and logits.dtype == jnp.float32
    print("KERNEL_OK")
</pallas_src>

<mosaic_0001>
module attributes {stable_mosaic.version = 11 : i64} {
  func.func @_fused_mlp_kernel(%arg0: i32, %arg1: memref<16x32xf32, #tpu.memory_space<vmem>>, %arg2: memref<32x64xbf16, #tpu.memory_space<vmem>>, %arg3: memref<1x64xf32, #tpu.memory_space<vmem>>, %arg4: memref<1x64xf32, #tpu.memory_space<vmem>>, %arg5: memref<1x64xf32, #tpu.memory_space<vmem>>, %arg6: memref<64x32xbf16, #tpu.memory_space<vmem>>, %arg7: memref<1x32xf32, #tpu.memory_space<vmem>>, %arg8: memref<1x32xf32, #tpu.memory_space<vmem>>, %arg9: memref<1x32xf32, #tpu.memory_space<vmem>>, %arg10: memref<16x32xf32, #tpu.memory_space<vmem>>) attributes {dimension_semantics = [#tpu.dimension_semantics<parallel>], iteration_bounds = array<i64: 1>, scalar_prefetch = 0 : i64, scratch_operands = 0 : i64, tpu.core_type = #tpu.core_type<tc>, window_params = [{transform_indices = @transform_0, window_bounds = array<i64: 16, 32>}, {pipeline_mode = #tpu.pipeline_mode<synchronous>, transform_indices = @transform_1, window_bounds = array<i64: 32, 64>}, {pipeline_mode = #tpu.pipeline_mode<synchronous>, transform_indices = @transform_2, window_bounds = array<i64: 1, 64>}, {pipeline_mode = #tpu.pipeline_mode<synchronous>, transform_indices = @transform_3, window_bounds = array<i64: 1, 64>}, {pipeline_mode = #tpu.pipeline_mode<synchronous>, transform_indices = @transform_4, window_bounds = array<i64: 1, 64>}, {pipeline_mode = #tpu.pipeline_mode<synchronous>, transform_indices = @transform_5, window_bounds = array<i64: 64, 32>}, {pipeline_mode = #tpu.pipeline_mode<synchronous>, transform_indices = @transform_6, window_bounds = array<i64: 1, 32>}, {pipeline_mode = #tpu.pipeline_mode<synchronous>, transform_indices = @transform_7, window_bounds = array<i64: 1, 32>}, {pipeline_mode = #tpu.pipeline_mode<synchronous>, transform_indices = @transform_8, window_bounds = array<i64: 1, 32>}, {transform_indices = @transform_9, window_bounds = array<i64: 16, 32>}]} {
    %c0 = arith.constant 0 : index
    %c0_0 = arith.constant 0 : index
    %0 = vector.load %arg1[%c0, %c0_0] : memref<16x32xf32, #tpu.memory_space<vmem>>, vector<16x32xf32>
    %1 = arith.truncf %0 : vector<16x32xf32> to vector<16x32xbf16>
    %c0_1 = arith.constant 0 : index
    %c0_2 = arith.constant 0 : index
    %2 = vector.load %arg2[%c0_1, %c0_2] : memref<32x64xbf16, #tpu.memory_space<vmem>>, vector<32x64xbf16>
    %cst = arith.constant dense<0.000000e+00> : vector<16x64xf32>
    %3 = tpu.matmul %1, %2, %cst {dimension_numbers = #tpu.dot_dimension_numbers<[1], [0], [0], [1], [0, 0, 1, 1], [], []>} : vector<16x32xbf16>, vector<32x64xbf16>, vector<16x64xf32> -> vector<16x64xf32>
    %c0_3 = arith.constant 0 : index
    %c0_4 = arith.constant 0 : index
    %4 = vector.load %arg3[%c0_3, %c0_4] : memref<1x64xf32, #tpu.memory_space<vmem>>, vector<1x64xf32>
    %5 = vector.broadcast %4 : vector<1x64xf32> to vector<16x64xf32>
    %6 = arith.addf %3, %5 : vector<16x64xf32>
    %c0_5 = arith.constant 0 : index
    %c0_6 = arith.constant 0 : index
    %7 = vector.load %arg4[%c0_5, %c0_6] : memref<1x64xf32, #tpu.memory_space<vmem>>, vector<1x64xf32>
    %c0_7 = arith.constant 0 : index
    %c0_8 = arith.constant 0 : index
    %8 = vector.load %arg5[%c0_7, %c0_8] : memref<1x64xf32, #tpu.memory_space<vmem>>, vector<1x64xf32>
    %cst_9 = arith.constant 0.000000e+00 : f32
    %9 = vector.broadcast %cst_9 : f32 to vector<16x64xf32>
    %10 = arith.maximumf %6, %9 : vector<16x64xf32>
    %cst_10 = arith.constant dense<0.000000e+00> : vector<16xf32>
    %11 = vector.multi_reduction <add>, %10, %cst_10 [1] : vector<16x64xf32> to vector<16xf32>
    %12 = vector.shape_cast %11 : vector<16xf32> to vector<16x1xf32>
    %13 = arith.mulf %10, %10 : vector<16x64xf32>
    %cst_11 = arith.constant dense<0.000000e+00> : vector<16xf32>
    %14 = vector.multi_reduction <add>, %13, %cst_11 [1] : vector<16x64xf32> to vector<16xf32>
    %15 = vector.shape_cast %14 : vector<16xf32> to vector<16x1xf32>
    %cst_12 = arith.constant 1.562500e-02 : f32
    %16 = vector.broadcast %cst_12 : f32 to vector<16x1xf32>
    %17 = arith.mulf %12, %16 : vector<16x1xf32>
    %cst_13 = arith.constant 1.562500e-02 : f32
    %18 = vector.broadcast %cst_13 : f32 to vector<16x1xf32>
    %19 = arith.mulf %15, %18 : vector<16x1xf32>
    %20 = arith.mulf %17, %17 : vector<16x1xf32>
    %21 = arith.subf %19, %20 : vector<16x1xf32>
    %cst_14 = arith.constant 9.99999974E-6 : f32
    %22 = vector.broadcast %cst_14 : f32 to vector<16x1xf32>
    %23 = arith.addf %21, %22 : vector<16x1xf32>
    %24 = math.rsqrt %23 : vector<16x1xf32>
    %25 = vector.broadcast %17 : vector<16x1xf32> to vector<16x64xf32>
    %26 = arith.subf %10, %25 : vector<16x64xf32>
    %27 = vector.broadcast %24 : vector<16x1xf32> to vector<16x64xf32>
    %28 = arith.mulf %26, %27 : vector<16x64xf32>
    %29 = vector.broadcast %7 : vector<1x64xf32> to vector<16x64xf32>
    %30 = arith.mulf %28, %29 : vector<16x64xf32>
    %31 = vector.broadcast %8 : vector<1x64xf32> to vector<16x64xf32>
    %32 = arith.addf %30, %31 : vector<16x64xf32>
    %33 = arith.truncf %32 : vector<16x64xf32> to vector<16x64xbf16>
    %c0_15 = arith.constant 0 : index
    %c0_16 = arith.constant 0 : index
    %34 = vector.load %arg6[%c0_15, %c0_16] : memref<64x32xbf16, #tpu.memory_space<vmem>>, vector<64x32xbf16>
    %cst_17 = arith.constant dense<0.000000e+00> : vector<16x32xf32>
    %35 = tpu.matmul %33, %34, %cst_17 {dimension_numbers = #tpu.dot_dimension_numbers<[1], [0], [0], [1], [0, 0, 1, 1], [], []>} : vector<16x64xbf16>, vector<64x32xbf16>, vector<16x32xf32> -> vector<16x32xf32>
    %c0_18 = arith.constant 0 : index
    %c0_19 = arith.constant 0 : index
    %36 = vector.load %arg7[%c0_18, %c0_19] : memref<1x32xf32, #tpu.memory_space<vmem>>, vector<1x32xf32>
    %37 = vector.broadcast %36 : vector<1x32xf32> to vector<16x32xf32>
    %38 = arith.addf %35, %37 : vector<16x32xf32>
    %c0_20 = arith.constant 0 : index
    %c0_21 = arith.constant 0 : index
    %39 = vector.load %arg8[%c0_20, %c0_21] : memref<1x32xf32, #tpu.memory_space<vmem>>, vector<1x32xf32>
    %c0_22 = arith.constant 0 : index
    %c0_23 = arith.constant 0 : index
    %40 = vector.load %arg9[%c0_22, %c0_23] : memref<1x32xf32, #tpu.memory_space<vmem>>, vector<1x32xf32>
    %cst_24 = arith.constant 0.000000e+00 : f32
    %41 = vector.broadcast %cst_24 : f32 to vector<16x32xf32>
    %42 = arith.maximumf %38, %41 : vector<16x32xf32>
    %cst_25 = arith.constant dense<0.000000e+00> : vector<16xf32>
    %43 = vector.multi_reduction <add>, %42, %cst_25 [1] : vector<16x32xf32> to vector<16xf32>
    %44 = vector.shape_cast %43 : vector<16xf32> to vector<16x1xf32>
    %45 = arith.mulf %42, %42 : vector<16x32xf32>
    %cst_26 = arith.constant dense<0.000000e+00> : vector<16xf32>
    %46 = vector.multi_reduction <add>, %45, %cst_26 [1] : vector<16x32xf32> to vector<16xf32>
    %47 = vector.shape_cast %46 : vector<16xf32> to vector<16x1xf32>
    %cst_27 = arith.constant 3.125000e-02 : f32
    %48 = vector.broadcast %cst_27 : f32 to vector<16x1xf32>
    %49 = arith.mulf %44, %48 : vector<16x1xf32>
    %cst_28 = arith.constant 3.125000e-02 : f32
    %50 = vector.broadcast %cst_28 : f32 to vector<16x1xf32>
    %51 = arith.mulf %47, %50 : vector<16x1xf32>
    %52 = arith.mulf %49, %49 : vector<16x1xf32>
    %53 = arith.subf %51, %52 : vector<16x1xf32>
    %cst_29 = arith.constant 9.99999974E-6 : f32
    %54 = vector.broadcast %cst_29 : f32 to vector<16x1xf32>
    %55 = arith.addf %53, %54 : vector<16x1xf32>
    %56 = math.rsqrt %55 : vector<16x1xf32>
    %57 = vector.broadcast %49 : vector<16x1xf32> to vector<16x32xf32>
    %58 = arith.subf %42, %57 : vector<16x32xf32>
    %59 = vector.broadcast %56 : vector<16x1xf32> to vector<16x32xf32>
    %60 = arith.mulf %58, %59 : vector<16x32xf32>
    %61 = vector.broadcast %39 : vector<1x32xf32> to vector<16x32xf32>
    %62 = arith.mulf %60, %61 : vector<16x32xf32>
    %63 = vector.broadcast %40 : vector<1x32xf32> to vector<16x32xf32>
    %64 = arith.addf %62, %63 : vector<16x32xf32>
    %c0_30 = arith.constant 0 : index
    %c0_31 = arith.constant 0 : index
    %65 = vector.load %arg10[%c0_30, %c0_31] : memref<16x32xf32, #tpu.memory_space<vmem>>, vector<16x32xf32>
    tpu.vector_store %arg10[%c0_30, %c0_31], %64 {strides = array<i32>} : memref<16x32xf32, #tpu.memory_space<vmem>>, vector<16x32xf32>,
    return
  }
  func.func @transform_0(%arg0: i32) -> (i32, i32) {
    %c0_i32 = arith.constant 0 : i32
    %c0_i32_0 = arith.constant 0 : i32
    return %arg0, %c0_i32 : i32, i32
  }
  func.func @transform_1(%arg0: i32) -> (i32, i32) {
    %c0_i32 = arith.constant 0 : i32
    %c0_i32_0 = arith.constant 0 : i32
    %c0_i32_1 = arith.constant 0 : i32
    return %c0_i32, %c0_i32_0 : i32, i32
  }
  func.func @transform_2(%arg0: i32) -> (i32, i32) {
    %c0_i32 = arith.constant 0 : i32
    %c0_i32_0 = arith.constant 0 : i32
    %c0_i32_1 = arith.constant 0 : i32
    return %c0_i32, %c0_i32_0 : i32, i32
  }
  func.func @transform_3(%arg0: i32) -> (i32, i32) {
    %c0_i32 = arith.constant 0 : i32
    %c0_i32_0 = arith.constant 0 : i32
    %c0_i32_1 = arith.constant 0 : i32
    return %c0_i32, %c0_i32_0 : i32, i32
  }
  func.func @transform_4(%arg0: i32) -> (i32, i32) {
    %c0_i32 = arith.constant 0 : i32
    %c0_i32_0 = arith.constant 0 : i32
    %c0_i32_1 = arith.constant 0 : i32
    return %c0_i32, %c0_i32_0 : i32, i32
  }
  func.func @transform_5(%arg0: i32) -> (i32, i32) {
    %c0_i32 = arith.constant 0 : i32
    %c0_i32_0 = arith.constant 0 : i32
    %c0_i32_1 = arith.constant 0 : i32
    return %c0_i32, %c0_i32_0 : i32, i32
  }
  func.func @transform_6(%arg0: i32) -> (i32, i32) {
    %c0_i32 = arith.constant 0 : i32
    %c0_i32_0 = arith.constant 0 : i32
    %c0_i32_1 = arith.constant 0 : i32
    return %c0_i32, %c0_i32_0 : i32, i32
  }
  func.func @transform_7(%arg0: i32) -> (i32, i32) {
    %c0_i32 = arith.constant 0 : i32
    %c0_i32_0 = arith.constant 0 : i32
    %c0_i32_1 = arith.constant 0 : i32
    return %c0_i32, %c0_i32_0 : i32, i32
  }
  func.func @transform_8(%arg0: i32) -> (i32, i32) {
    %c0_i32 = arith.constant 0 : i32
    %c0_i32_0 = arith.constant 0 : i32
    %c0_i32_1 = arith.constant 0 : i32
    return %c0_i32, %c0_i32_0 : i32, i32
  }
  func.func @transform_9(%arg0: i32) -> (i32, i32) {
    %c0_i32 = arith.constant 0 : i32
    %c0_i32_0 = arith.constant 0 : i32
    return %arg0, %c0_i32 : i32, i32
  }
}

</mosaic_0001>

<llo_original>
// kernel: tpu_custom_call.1
$region0: #{tpu_custom_call.1}
  #allocation0 [shape = 'u32[]', space=smem, size = 0x4, offset = 0x4, fixed_abs, tag = 'smem constant byte address 0x4 - core index']
  #allocation1 [shape = 'u32[72,128]{1,0:T(1,128)}', space=vmem, size = 0x9000, scoped, tag = 'internal scratch']
  %s0 = inlined_call_operand.vmem [shape: f32[16,32], index: 0, kind: input, shape index: {}]
  %s1 = inlined_call_operand.vmem [shape: bf16[32,64], index: 1, kind: input, shape index: {}]
  %s2 = inlined_call_operand.vmem [shape: f32[1,64], index: 2, kind: input, shape index: {}]
  %s3 = inlined_call_operand.vmem [shape: f32[1,64], index: 3, kind: input, shape index: {}]
  %s4 = inlined_call_operand.vmem [shape: f32[1,64], index: 4, kind: input, shape index: {}]
  %s5 = inlined_call_operand.vmem [shape: bf16[64,32], index: 5, kind: input, shape index: {}]
  %s6 = inlined_call_operand.vmem [shape: f32[1,32], index: 6, kind: input, shape index: {}]
  %s7 = inlined_call_operand.vmem [shape: f32[1,32], index: 7, kind: input, shape index: {}]
  %s8 = inlined_call_operand.vmem [shape: f32[1,32], index: 8, kind: input, shape index: {}]
  %s9 = inlined_call_operand.hbm [shape: f32[16,32], index: 9, kind: output, shape index: {}]
  %s10 = sld [smem:[#allocation0]]
  $region46: #{tpu_custom_call.1} parent=0
    _
  %s12 = ssub.s32 1, %s10
  %s13 = scalar_select 0, %s12, %s10
  $region1: #{tpu_custom_call.1} parent=0
    #allocation2 [shape = 'u8[8192]{0}', space=vmem, size = 0x2000, scoped, tag = 'output window, operand 0, single buffered']
    #allocation3 [shape = 's32[1]{0}', space=sflag, size = 0x4, scoped, tag = 'scoped memory for tpu_custom_call.1']
    %14 = vsyncpa [#allocation3], 0
    // Predicated region
    $region2: #{tpu_custom_call.1} parent=1 // pred_check
      _
    $region3: #{tpu_custom_call.1} parent=1 // pred_check_branch
      %16 = sbr.rel (0) target = $region5
    $region4: #{tpu_custom_call.1} parent=1 // pred_region
      _
    $region5: #{tpu_custom_call.1} parent=1 // pred_fallthru
      _
    // Predicated region
    $region6: #{tpu_custom_call.1} parent=1 // pred_check
      _
    $region7: #{tpu_custom_call.1} parent=1 // pred_check_branch
      %18 = sbr.rel (0) target = $region9
    $region8: #{tpu_custom_call.1} parent=1 // pred_region
      _
    $region9: #{tpu_custom_call.1} parent=1 // pred_fallthru
      _
    // Predicated region
    $region10: #{tpu_custom_call.1} parent=1 // pred_check
      _
    $region11: #{tpu_custom_call.1} parent=1 // pred_check_branch
      %20 = sbr.rel (0) target = $region13
    $region12: #{tpu_custom_call.1} parent=1 // pred_region
      _
    $region13: #{tpu_custom_call.1} parent=1 // pred_fallthru
      _
    // Predicated region
    $region14: #{tpu_custom_call.1} parent=1 // pred_check
      _
    $region15: #{tpu_custom_call.1} parent=1 // pred_check_branch
      %22 = sbr.rel (0) target = $region17
    $region16: #{tpu_custom_call.1} parent=1 // pred_region
      _
    $region17: #{tpu_custom_call.1} parent=1 // pred_fallthru
      _
    // Predicated region
    $region18: #{tpu_custom_call.1} parent=1 // pred_check
      _
    $region19: #{tpu_custom_call.1} parent=1 // pred_check_branch
      %24 = sbr.rel (0) target = $region21
    $region20: #{tpu_custom_call.1} parent=1 // pred_region
      _
    $region21: #{tpu_custom_call.1} parent=1 // pred_fallthru
      _
    // Predicated region
    $region22: #{tpu_custom_call.1} parent=1 // pred_check
      _
    $region23: #{tpu_custom_call.1} parent=1 // pred_check_branch
      %26 = sbr.rel (0) target = $region25
    $region24: #{tpu_custom_call.1} parent=1 // pred_region
      _
    $region25: #{tpu_custom_call.1} parent=1 // pred_fallthru
      _
    // Predicated region
    $region26: #{tpu_custom_call.1} parent=1 // pred_check
      _
    $region27: #{tpu_custom_call.1} parent=1 // pred_check_branch
      %28 = sbr.rel (0) target = $region29
    $region28: #{tpu_custom_call.1} parent=1 // pred_region
      _
    $region29: #{tpu_custom_call.1} parent=1 // pred_fallthru
      _
    // Predicated region
    $region30: #{tpu_custom_call.1} parent=1 // pred_check
      _
    $region31: #{tpu_custom_call.1} parent=1 // pred_check_branch
      %30 = sbr.rel (0) target = $region33
    $region32: #{tpu_custom_call.1} parent=1 // pred_region
      _
    $region33: #{tpu_custom_call.1} parent=1 // pred_fallthru
      _
    // Predicated region
    $region34: #{tpu_custom_call.1} parent=1 // pred_check
      _
    $region35: #{tpu_custom_call.1} parent=1 // pred_check_branch
      %32 = sbr.rel (0) target = $region37
    $region36: #{tpu_custom_call.1} parent=1 // pred_region
      _
    $region37: #{tpu_custom_call.1} parent=1 // pred_fallthru
      _
    %v34 = vld [vmem:[%s0] sm:$0xff]
    %v35 = vld [vmem:[%s0 + $0x8] sm:$0xff]
    %v36 = vpack.c.bf16 %v35, %v34
    %v37 = vld [vmem:[%s1] sm:$0xf]
    %v38 = vld [vmem:[%s1 + $0x4] sm:$0xf]
    %v39 = vld [vmem:[%s1 + $0x8] sm:$0xf]
    %v40 = vld [vmem:[%s1 + $0xc] sm:$0xf]
    %v41 = vld [vmem:[%s2] sm:$0x1]
    %v43 = vperm.slane %v41, 0
    %v49 = vunpack.c.l.b16 %v37
    %v50 = vunpack.c.l.b16 %v38
    %v51 = vunpack.c.l.b16 %v39
    %v52 = vunpack.c.l.b16 %v40
    %v53 = vpack.c.b16 %v50, %v49
    %v54 = vpack.c.b16 %v52, %v51
    %vm57 = vcmask 261120
    %v59 = vsel %vm57, %v36, 0
    %61 = vmatpush.bf16.msra.mxu0 0
    %62 = vmatpush.bf16.msra.mxu0 0
    %63 = vmatpush.bf16.msra.mxu0 0
    %64 = vmatpush.bf16.msra.mxu0 0
    %65 = vmatpush.bf16.msra.mxu0 0
    %66 = vmatpush.bf16.msra.mxu0 0
    %67 = vmatpush.bf16.msra.mxu0 %v54
    %68 = vmatpush.bf16.msra.mxu0 %v53
    %69 = vmatmul.bf16.gmra.mxu0 %v59
    %v70 = vpop.f32.mrf.mxu0
    %v71 = vadd.f32 %v43, %v70
    %v72 = vpop.f32.mrf.mxu0
    %v73 = vadd.f32 %v43, %v72
    %74 = vdwg.mxu0
    %v75 = vld [vmem:[%s3] sm:$0x1]
    %v76 = vld [vmem:[%s4] sm:$0x1]
    %v77 = vmax.f32 %v71, 0.0
    %v78 = vmax.f32 %v73, 0.0
    %vm79 = vcmask 523264
    %v80 = vsel %vm79, %v77, 0.0
    %81 = vadd.xlane.f32.xlu0 %v80
    %v82 = vpop.xlane.xlu0 %81
    %v83 = vsel %vm79, %v78, 0.0
    %84 = vadd.xlane.f32.xlu0 %v83
    %v85 = vpop.xlane.xlu0 %84
    %v86 = vmul.f32 %v77, %v77
    %v87 = vmul.f32 %v78, %v78
    %v88 = vsel %vm79, %v86, 0.0
    %89 = vadd.xlane.f32.xlu0 %v88
    %v90 = vpop.xlane.xlu0 %89
    %v91 = vsel %vm79, %v87, 0.0
    %92 = vadd.xlane.f32.xlu0 %v91
    %v93 = vpop.xlane.xlu0 %92
    %v94 = vmul.f32 %v82, 0.015625
    %v95 = vmul.f32 %v85, 0.015625
    %v96 = vmul.f32 %v90, 0.015625
    %v97 = vmul.f32 %v93, 0.015625
    %v98 = vmul.f32 %v94, %v94
    %v99 = vmul.f32 %v95, %v95
    %v100 = vsub.f32 %v96, %v98
    %v101 = vsub.f32 %v97, %v99
    %v102 = vadd.f32 %v100, 1e-05
    %v103 = vadd.f32 %v101, 1e-05
    %v104 = vrsqrt.pop %v102
    %v105 = vmul.f32 %v104, %v102
    %v106 = vmul.f32 %v105, %v104
    %v107 = vmul.f32 0.5, %v106
    %v108 = vsub.f32 1.5, %v107
    %v109 = vmul.f32 %v104, %v108
    %vm110 = vweird.f32 %v102
    %vm111 = vweird.f32 %v104
    %vm112 = vmor %vm110, %vm111
    %v113 = vsel %vm112, %v104, %v109
    %v114 = vrsqrt.pop %v103
    %v115 = vmul.f32 %v114, %v103
    %v116 = vmul.f32 %v115, %v114
    %v117 = vmul.f32 0.5, %v116
    %v118 = vsub.f32 1.5, %v117
    %v119 = vmul.f32 %v114, %v118
    %vm120 = vweird.f32 %v103
    %vm121 = vweird.f32 %v114
    %vm122 = vmor %vm120, %vm121
    %v123 = vsel %vm122, %v114, %v119
    %v124 = vsub.f32 %v77, %v94
    %v125 = vsub.f32 %v78, %v95
    %v126 = vmul.f32 %v124, %v113
    %v127 = vmul.f32 %v125, %v123
    %v129 = vperm.slane %v75, 0
    %v131 = vmul.f32 %v126, %v129
    %v132 = vmul.f32 %v127, %v129
    %v134 = vperm.slane %v76, 0
    %v136 = vadd.f32 %v131, %v134
    %v137 = vadd.f32 %v132, %v134
    %v138 = vpack.c.bf16 %v137, %v136
    %v139 = vld [vmem:[%s5] sm:$0xf]
    %v140 = vld [vmem:[%s5 + $0x4] sm:$0xf]
    %v141 = vld [vmem:[%s5 + $0x8] sm:$0xf]
    %v142 = vld [vmem:[%s5 + $0xc] sm:$0xf]
    %v143 = vld [vmem:[%s5 + $0x10] sm:$0xf]
    %v144 = vld [vmem:[%s5 + $0x14] sm:$0xf]
    %v145 = vld [vmem:[%s5 + $0x18] sm:$0xf]
    %v146 = vld [vmem:[%s5 + $0x1c] sm:$0xf]
    %v147 = vld [vmem:[%s6] sm:$0x1]
    %v149 = vperm.slane %v147, 0
    %v159 = vunpack.c.l.b16 %v139
    %v160 = vunpack.c.l.b16 %v140
    %v161 = vunpack.c.l.b16 %v141
    %v162 = vunpack.c.l.b16 %v142
    %v163 = vunpack.c.l.b16 %v143
    %v164 = vunpack.c.l.b16 %v144
    %v165 = vunpack.c.l.b16 %v145
    %v166 = vunpack.c.l.b16 %v146
    %v167 = vpack.c.b16 %v160, %v159
    %v168 = vpack.c.b16 %v162, %v161
    %v169 = vpack.c.b16 %v164, %v163
    %v170 = vpack.c.b16 %v166, %v165
    %v176 = vsel %vm79, %v138, 0
    %178 = vmatpush.bf16.msra.mxu0 0
    %179 = vmatpush.bf16.msra.mxu0 0
    %180 = vmatpush.bf16.msra.mxu0 0
    %181 = vmatpush.bf16.msra.mxu0 0
    %182 = vmatpush.bf16.msra.mxu0 %v170
    %183 = vmatpush.bf16.msra.mxu0 %v169
    %184 = vmatpush.bf16.msra.mxu0 %v168
    %185 = vmatpush.bf16.msra.mxu0 %v167
    %186 = vmatmul.bf16.gmra.mxu0 %v176
    %v187 = vpop.f32.mrf.mxu0
    %v188 = vadd.f32 %v149, %v187
    %v189 = vpop.f32.mrf.mxu0
    %v190 = vadd.f32 %v149, %v189
    %191 = vdwg.mxu0
    %v192 = vld [vmem:[%s7] sm:$0x1]
    %v193 = vld [vmem:[%s8] sm:$0x1]
    %v194 = vmax.f32 %v188, 0.0
    %v195 = vmax.f32 %v190, 0.0
    %v196 = vsel %vm57, %v194, 0.0
    %197 = vadd.xlane.f32.xlu0 %v196
    %v198 = vpop.xlane.xlu0 %197
    %v199 = vsel %vm57, %v195, 0.0
    %200 = vadd.xlane.f32.xlu0 %v199
    %v201 = vpop.xlane.xlu0 %200
    %v202 = vmul.f32 %v194, %v194
    %v203 = vmul.f32 %v195, %v195
    %v204 = vsel %vm57, %v202, 0.0
    %205 = vadd.xlane.f32.xlu0 %v204
    %v206 = vpop.xlane.xlu0 %205
    %v207 = vsel %vm57, %v203, 0.0
    %208 = vadd.xlane.f32.xlu0 %v207
    %v209 = vpop.xlane.xlu0 %208
    %v210 = vmul.f32 %v198, 0.03125
    %v211 = vmul.f32 %v201, 0.03125
    %v212 = vmul.f32 %v206, 0.03125
    %v213 = vmul.f32 %v209, 0.03125
    %v214 = vmul.f32 %v210, %v210
    %v215 = vmul.f32 %v211, %v211
    %v216 = vsub.f32 %v212, %v214
    %v217 = vsub.f32 %v213, %v215
    %v218 = vadd.f32 %v216, 1e-05
    %v219 = vadd.f32 %v217, 1e-05
    %v220 = vrsqrt.pop %v218
    %v221 = vmul.f32 %v220, %v218
    %v222 = vmul.f32 %v221, %v220
    %v223 = vmul.f32 0.5, %v222
    %v224 = vsub.f32 1.5, %v223
    %v225 = vmul.f32 %v220, %v224
    %vm226 = vweird.f32 %v218
    %vm227 = vweird.f32 %v220
    %vm228 = vmor %vm226, %vm227
    %v229 = vsel %vm228, %v220, %v225
    %v230 = vrsqrt.pop %v219
    %v231 = vmul.f32 %v230, %v219
    %v232 = vmul.f32 %v231, %v230
    %v233 = vmul.f32 0.5, %v232
    %v234 = vsub.f32 1.5, %v233
    %v235 = vmul.f32 %v230, %v234
    %vm236 = vweird.f32 %v219
    %vm237 = vweird.f32 %v230
    %vm238 = vmor %vm236, %vm237
    %v239 = vsel %vm238, %v230, %v235
    %v240 = vsub.f32 %v194, %v210
    %v241 = vsub.f32 %v195, %v211
    %v242 = vmul.f32 %v240, %v229
    %v243 = vmul.f32 %v241, %v239
    %v245 = vperm.slane %v192, 0
    %v247 = vmul.f32 %v242, %v245
    %v248 = vmul.f32 %v243, %v245
    %v250 = vperm.slane %v193, 0
    %v252 = vadd.f32 %v247, %v250
    %v253 = vadd.f32 %v248, %v250
    %254 = vst.msk [vmem:[#allocation2] sm:$0xff] %vm57, %v252
    %255 = vst.msk [vmem:[#allocation2 + $0x8] sm:$0xff] %vm57, %v253
    // Predicated region
    $region38: #{tpu_custom_call.1} parent=1 // pred_check
      _
    $region39: #{tpu_custom_call.1} parent=1 // pred_check_branch
      %257 = sbr.rel (0) target = $region41
    $region40: #{tpu_custom_call.1} parent=1 // pred_region
      %259 = vsyncadd [#allocation3], 0
      %s260 = sshll.u32 [#allocation2], 4
      %s261 = int_to_ptr.vmem [resolvable:$true] %s260
      %s262 = sshll.u32 %s9, 4
      %s263 = int_to_ptr.hbm [resolvable:$true] %s262
      %268 = dma.vmem_to_hbm [thread:$0]  %s261, 256, %s263, [#allocation3], 128, 128, 8
    $region41: #{tpu_custom_call.1} parent=1 // pred_fallthru
      _
    // Predicated region
    $region42: #{tpu_custom_call.1} parent=1 // pred_check
      _
    $region43: #{tpu_custom_call.1} parent=1 // pred_check_branch
      %270 = sbr.rel (0) target = $region45
    $region44: #{tpu_custom_call.1} parent=1 // pred_region
      %272 = dma.done [#allocation3], 256
    $region45: #{tpu_custom_call.1} parent=1 // pred_fallthru
      _
    %273 = vsyncpa [#allocation3], 1

</llo_original>
